<compile_context>
chip_gen: v5e
topology: v5e:2x2
jax: 0.10.0
libtpu: 0.0.40
codegen_flags: <defaults>
</compile_context>

<pallas_src>
import functools

import jax
import jax.numpy as jnp
from jax import lax
from jax.experimental import pallas as pl
from jax.experimental.pallas import tpu as pltpu


def _max_pool_kernel(x_ref, o_ref, acc_ref, *, seq_len, tl, need_mask):
    # x_ref  : (tm, tl)  input tile (rows = flattened N*C, cols = length chunk)
    # o_ref  : (1, tm)   lane-dense output block (same block for every k)
    # acc_ref: (1, tm)   f32 running max, persists across the k (length) axis
    k = pl.program_id(1)

    @pl.when(k == 0)
    def _init():
        acc_ref[...] = jnp.full_like(acc_ref, -jnp.inf)

    x = x_ref[...]
    if need_mask:
        # Mask the out-of-bounds tail of the last length tile so padding
        # garbage can never win the max.
        col = lax.broadcasted_iota(jnp.int32, x.shape, 1)
        valid = (k * tl + col) < seq_len
        x = jnp.where(valid, x, -jnp.inf)

    row_max = jnp.max(x, axis=-1)                      # (tm,)
    acc_ref[...] = jnp.maximum(acc_ref[...], row_max[None, :].astype(jnp.float32))

    @pl.when(k == pl.num_programs(1) - 1)
    def _finalize():
        o_ref[...] = acc_ref[...].astype(o_ref.dtype)


def slot_adaptive_pool(x: jax.Array, *, tm: int = 256, tl: int = 2048) -> jax.Array:
    """AdaptiveMaxPool1d(output_size=1) over the last axis of (N, C, L)."""
    n, c, l = x.shape
    m = n * c
    x2 = x.reshape(m, l)

    # Clamp tiles to the array extents (full-extent blocks are always legal).
    # tm default 256: multiple of 8 (input sublanes) and 128 (output lanes).
    tm_eff = tm if m > tm else m
    tl_eff = tl if l > tl else l
    need_mask = (l % tl_eff) != 0

    grid = (pl.cdiv(m, tm_eff), pl.cdiv(l, tl_eff))

    kernel = functools.partial(
        _max_pool_kernel, seq_len=l, tl=tl_eff, need_mask=need_mask
    )

    out = pl.pallas_call(
        kernel,
        out_shape=jax.ShapeDtypeStruct((1, m), x.dtype),
        grid_spec=pltpu.PrefetchScalarGridSpec(
            num_scalar_prefetch=0,
            grid=grid,
            in_specs=[pl.BlockSpec((tm_eff, tl_eff), lambda i, k: (i, k))],
            # Same output block for every k -> resident accumulator pattern;
            # lane-dense last dim (tm_eff) avoids masked partial stores.
            out_specs=pl.BlockSpec((1, tm_eff), lambda i, k: (0, i)),
            scratch_shapes=[pltpu.VMEM((1, tm_eff), jnp.float32)],
        ),
        compiler_params=pltpu.CompilerParams(
            dimension_semantics=("parallel", "arbitrary"),
            # Explicit budget: ~4 MiB actually used; 32 MiB is safe on
            # v5e (128 MiB phys), v6e (128 MiB), and v7x (64 MiB).
            vmem_limit_bytes=32 * 1024 * 1024,
        ),
    )(x2)

    return out.reshape(n, c, 1)


if __name__ == "__main__":
    key = jax.random.PRNGKey(0)

    # Small shape consistent with AdaptiveMaxPool1d input (N, C, L).
    x = jax.random.normal(key, (2, 4, 16), dtype=jnp.float32)
    out = jax.block_until_ready(slot_adaptive_pool(x))
    ref = jnp.max(x, axis=-1, keepdims=True)
    assert out.shape == (2, 4, 1)
    assert jnp.allclose(out, ref), "mismatch vs reference (small case)"

    # Second small case that exercises L-axis tiling, the running-max
    # accumulator across grid steps, and the padded-tail mask (200 % 128 != 0).
    key2, _ = jax.random.split(key)
    x_tail = jax.random.normal(key2, (2, 4, 200), dtype=jnp.float32)
    out_tail = jax.block_until_ready(slot_adaptive_pool(x_tail, tm=256, tl=128))
    ref_tail = jnp.max(x_tail, axis=-1, keepdims=True)
    assert out_tail.shape == (2, 4, 1)
    assert jnp.allclose(out_tail, ref_tail), "mismatch vs reference (tiled case)"

    print("KERNEL_OK")
</pallas_src>

<mosaic_0001>
module attributes {stable_mosaic.version = 11 : i64} {
  func.func @_max_pool_kernel(%arg0: i32, %arg1: i32, %arg2: memref<8x16xf32, #tpu.memory_space<vmem>>, %arg3: memref<1x8xf32, #tpu.memory_space<vmem>>, %arg4: memref<1x8xf32, #tpu.memory_space<vmem>>) attributes {dimension_semantics = [#tpu.dimension_semantics<parallel>, #tpu.dimension_semantics<arbitrary>], iteration_bounds = array<i64: 1, 1>, scalar_prefetch = 0 : i64, scratch_operands = 1 : i64, tpu.core_type = #tpu.core_type<tc>, window_params = [{transform_indices = @transform_0, window_bounds = array<i64: 8, 16>}, {transform_indices = @transform_1, window_bounds = array<i64: 1, 8>}]} {
    %c0_i32 = arith.constant 0 : i32
    %0 = arith.cmpi eq, %arg1, %c0_i32 : i32
    %1 = arith.extui %0 : i1 to i32
    %c0_i32_0 = arith.constant 0 : i32
    %2 = arith.cmpi ne, %1, %c0_i32_0 : i32
    scf.if %2 {
      %cst_8 = arith.constant 0xFF800000 : f32
      %12 = vector.broadcast %cst_8 : f32 to vector<1x8xf32>
      %c0_9 = arith.constant 0 : index
      %c0_10 = arith.constant 0 : index
      %13 = vector.load %arg4[%c0_9, %c0_10] : memref<1x8xf32, #tpu.memory_space<vmem>>, vector<1x8xf32>
      tpu.vector_store %arg4[%c0_9, %c0_10], %12 {strides = array<i32>} : memref<1x8xf32, #tpu.memory_space<vmem>>, vector<1x8xf32>,
    } else {
    }
    %c0 = arith.constant 0 : index
    %c0_1 = arith.constant 0 : index
    %3 = vector.load %arg2[%c0, %c0_1] : memref<8x16xf32, #tpu.memory_space<vmem>>, vector<8x16xf32>
    %cst = arith.constant dense<0xFF800000> : vector<8xf32>
    %4 = vector.multi_reduction <maximumf>, %3, %cst [1] : vector<8x16xf32> to vector<8xf32>
    %c0_2 = arith.constant 0 : index
    %c0_3 = arith.constant 0 : index
    %5 = vector.load %arg4[%c0_2, %c0_3] : memref<1x8xf32, #tpu.memory_space<vmem>>, vector<1x8xf32>
    %6 = vector.shape_cast %4 : vector<8xf32> to vector<1x8xf32>
    %7 = arith.maximumf %5, %6 : vector<1x8xf32>
    %c0_4 = arith.constant 0 : index
    %c0_5 = arith.constant 0 : index
    %8 = vector.load %arg4[%c0_4, %c0_5] : memref<1x8xf32, #tpu.memory_space<vmem>>, vector<1x8xf32>
    tpu.vector_store %arg4[%c0_4, %c0_5], %7 {strides = array<i32>} : memref<1x8xf32, #tpu.memory_space<vmem>>, vector<1x8xf32>,
    %c0_i32_6 = arith.constant 0 : i32
    %9 = arith.cmpi eq, %arg1, %c0_i32_6 : i32
    %10 = arith.extui %9 : i1 to i32
    %c0_i32_7 = arith.constant 0 : i32
    %11 = arith.cmpi ne, %10, %c0_i32_7 : i32
    scf.if %11 {
      %c0_8 = arith.constant 0 : index
      %c0_9 = arith.constant 0 : index
      %12 = vector.load %arg4[%c0_8, %c0_9] : memref<1x8xf32, #tpu.memory_space<vmem>>, vector<1x8xf32>
      %c0_10 = arith.constant 0 : index
      %c0_11 = arith.constant 0 : index
      %13 = vector.load %arg3[%c0_10, %c0_11] : memref<1x8xf32, #tpu.memory_space<vmem>>, vector<1x8xf32>
      tpu.vector_store %arg3[%c0_10, %c0_11], %12 {strides = array<i32>} : memref<1x8xf32, #tpu.memory_space<vmem>>, vector<1x8xf32>,
    } else {
    }
    return
  }
  func.func @transform_0(%arg0: i32, %arg1: i32) -> (i32, i32) {
    %c0_i32 = arith.constant 0 : i32
    return %arg0, %arg1 : i32, i32
  }
  func.func @transform_1(%arg0: i32, %arg1: i32) -> (i32, i32) {
    %c0_i32 = arith.constant 0 : i32
    %c0_i32_0 = arith.constant 0 : i32
    return %c0_i32, %arg0 : i32, i32
  }
}

</mosaic_0001>

<llo_original>
// kernel: tpu_custom_call.1
$region0: #{tpu_custom_call.1}
  #allocation0 [shape = 'u32[]', space=smem, size = 0x4, offset = 0x4, fixed_abs, tag = 'smem constant byte address 0x4 - core index']
  #allocation1 [shape = 'u32[72,128]{1,0:T(1,128)}', space=vmem, size = 0x9000, scoped, tag = 'internal scratch']
  #allocation2 [shape = 'f32[1,8]{1,0:T(1,128)}', space=vmem, size = 0x200, scoped, tag = 'scratch operand']
  %s0 = inlined_call_operand.hbm [shape: f32[8,16], index: 0, kind: input, shape index: {}]
  %s1 = inlined_call_operand.hbm [shape: f32[1,8], index: 1, kind: output, shape index: {}]
  %s2 = sld [smem:[#allocation0]]
  $region26: #{tpu_custom_call.1} parent=0
    _
  %s4 = ssub.s32 1, %s2
  %s5 = scalar_select 0, %s4, %s2
  $region1: #{tpu_custom_call.1} parent=0
    #allocation3 [shape = 'u8[4096]{0}', space=vmem, size = 0x1000, scoped, tag = 'input window, operand 0, single buffered']
    #allocation4 [shape = 's32[1]{0}', space=sflag, size = 0x4, scoped, tag = 'scoped memory for tpu_custom_call.1']
    #allocation5 [shape = 's32[1]{0}', space=sflag, size = 0x4, scoped, tag = 'scoped memory for tpu_custom_call.1']
    #allocation6 [shape = 'u8[512]{0}', space=vmem, size = 0x400, scoped, tag = 'output window, operand 0, single buffered']
    %6 = vsyncpa [#allocation4], 0
    %7 = vsyncpa [#allocation5], 0
    // Predicated region
    $region2: #{tpu_custom_call.1} parent=1 // pred_check
      _
    $region3: #{tpu_custom_call.1} parent=1 // pred_check_branch
      %9 = sbr.rel (0) target = $region5
    $region4: #{tpu_custom_call.1} parent=1 // pred_region
      %11 = vsyncadd [#allocation4], 0
      %s13 = sshll.u32 %s0, 4
      %s14 = int_to_ptr.hbm [resolvable:$true] %s13
      %s15 = sshll.u32 [#allocation3], 4
      %s16 = int_to_ptr.vmem [resolvable:$true] %s15
      %18 = dma.hbm_to_vmem [thread:$0]  %s14, 128, %s16, [#allocation4]
    $region5: #{tpu_custom_call.1} parent=1 // pred_fallthru
      _
    // Predicated region
    $region6: #{tpu_custom_call.1} parent=1 // pred_check
      _
    $region7: #{tpu_custom_call.1} parent=1 // pred_check_branch
      %20 = sbr.rel (0) target = $region9
    $region8: #{tpu_custom_call.1} parent=1 // pred_region
      %22 = dma.done [#allocation4], 128
    $region9: #{tpu_custom_call.1} parent=1 // pred_fallthru
      _
    %p23 = scmp.eq.s32.totalorder 0, 0
    // Predicated region
    $region10: #{tpu_custom_call.1} parent=1 // pred_check
      %p24 = pneg %p23
    $region11: #{tpu_custom_call.1} parent=1 // pred_check_branch
      %26 = sbr.rel (%p24) target = $region13
    $region12: #{tpu_custom_call.1} parent=1 // pred_region
      %vm27 = vcmask 57344
      %28 = vst.msk [vmem:[#allocation2] sm:$0x1] %vm27, -inf
    $region13: #{tpu_custom_call.1} parent=1 // pred_fallthru
      _
    %v29 = vld [vmem:[#allocation3] sm:$0xff]
    %vm30 = vcmask 130048
    %v31 = vsel %vm30, %v29, -inf
    %32 = vmax.xlane.f32.xlu0 %v31
    %v33 = vpop.xlane.xlu0 %32
    %v34 = vld [vmem:[#allocation2] sm:$0x1]
    %v36 = vperm.slane %v33, 0
    %v37 = vperm.slane %v33, 1
    %v38 = vperm.slane %v33, 2
    %v39 = vperm.slane %v33, 3
    %v40 = vperm.slane %v33, 4
    %v41 = vperm.slane %v33, 5
    %v42 = vperm.slane %v33, 6
    %v43 = vperm.slane %v33, 7
    %44 = vst [vmem:[#allocation1] ss:$9 sm:$0xff] %v36
    %s45 = scalar_lea.vmem [#allocation1], 1
    %46 = vst [vmem:[%s45] ss:$9 sm:$0xff] %v37
    %s47 = scalar_lea.vmem [#allocation1], 2
    %48 = vst [vmem:[%s47] ss:$9 sm:$0xff] %v38
    %s49 = scalar_lea.vmem [#allocation1], 3
    %50 = vst [vmem:[%s49] ss:$9 sm:$0xff] %v39
    %s51 = scalar_lea.vmem [#allocation1], 4
    %52 = vst [vmem:[%s51] ss:$9 sm:$0xff] %v40
    %s53 = scalar_lea.vmem [#allocation1], 5
    %54 = vst [vmem:[%s53] ss:$9 sm:$0xff] %v41
    %s55 = scalar_lea.vmem [#allocation1], 6
    %56 = vst [vmem:[%s55] ss:$9 sm:$0xff] %v42
    %s57 = scalar_lea.vmem [#allocation1], 7
    %58 = vst [vmem:[%s57] ss:$9 sm:$0xff] %v43
    %v59 = vld [vmem:[#allocation1] sm:$0xff]
    %60 = vset.pattern.permute.xlu0 0
    %61 = vperm.xlu0 %60, %v59
    %v62 = vpop.permute.xlu0 %61
    %v63 = vlaneseq
    %v64 = vand.u32 %v63, 127
    %v65 = vperm.slane %v62, %v64
    %v67 = vmax.f32 %v34, %v65
    %vm68 = vcmask 57344
    %69 = vst.msk [vmem:[#allocation2] sm:$0x1] %vm68, %v67
    // Predicated region
    $region14: #{tpu_custom_call.1} parent=1 // pred_check
      %p70 = pneg %p23
    $region15: #{tpu_custom_call.1} parent=1 // pred_check_branch
      %72 = sbr.rel (%p70) target = $region17
    $region16: #{tpu_custom_call.1} parent=1 // pred_region
      %v73 = vld [vmem:[#allocation2] sm:$0x1]
      %74 = vst.msk [vmem:[#allocation6] sm:$0x1] %vm68, %v73
    $region17: #{tpu_custom_call.1} parent=1 // pred_fallthru
      _
    // Predicated region
    $region18: #{tpu_custom_call.1} parent=1 // pred_check
      _
    $region19: #{tpu_custom_call.1} parent=1 // pred_check_branch
      %76 = sbr.rel (0) target = $region21
    $region20: #{tpu_custom_call.1} parent=1 // pred_region
      %78 = vsyncadd [#allocation5], 0
      %s80 = sshll.u32 [#allocation6], 4
      %s81 = int_to_ptr.vmem [resolvable:$true] %s80
      %s82 = sshll.u32 %s1, 4
      %s83 = int_to_ptr.hbm [resolvable:$true] %s82
      %85 = dma.vmem_to_hbm [thread:$0]  %s81, 16, %s83, [#allocation5]
    $region21: #{tpu_custom_call.1} parent=1 // pred_fallthru
      _
    // Predicated region
    $region22: #{tpu_custom_call.1} parent=1 // pred_check
      _
    $region23: #{tpu_custom_call.1} parent=1 // pred_check_branch
      %87 = sbr.rel (0) target = $region25
    $region24: #{tpu_custom_call.1} parent=1 // pred_region
      %89 = dma.done [#allocation5], 16
    $region25: #{tpu_custom_call.1} parent=1 // pred_fallthru
      _
    %90 = vsyncpa [#allocation4], 1
    %91 = vsyncpa [#allocation5], 1

</llo_original>
